<compile_context>
chip_gen: v6e
topology: v6e:2x2x1
jax: 0.10.0
libtpu: 0.0.40
codegen_flags: <defaults>
</compile_context>

<pallas_src>
import jax
import jax.numpy as jnp
from jax.experimental import pallas as pl
from jax.experimental.pallas import tpu as pltpu


def _round_up(x, m):
    return ((x + m - 1) // m) * m


def _epilogue_dtype():
    """bf16 bias+ReLU epilogue on chips with a bf16 VPU (v6e/v7x), f32 otherwise."""
    try:
        kind = jax.devices()[0].device_kind.lower()
    except Exception:
        return jnp.float32
    if any(tag in kind for tag in ("v6", "v7", "7x")):
        return jnp.bfloat16
    return jnp.float32


# ---------------------------------------------------------------------------
# Kernels
# ---------------------------------------------------------------------------

def _layers12(x_ref, w1_ref, b1_ref, w2_ref, b2_ref):
    """Shared Linear->ReLU->Linear->ReLU body (bf16 MXU operands, f32 accum)."""
    x = x_ref[...]
    if x.dtype != jnp.bfloat16:          # accept bf16 obs directly if provided
        x = x.astype(jnp.bfloat16)
    ep = b1_ref.dtype                    # epilogue dtype (bf16 on v6e/v7x, f32 on v5e)
    h = jnp.dot(x, w1_ref[...], preferred_element_type=jnp.float32)
    h = jnp.maximum(h.astype(ep) + b1_ref[...], 0)
    h = jnp.dot(h.astype(jnp.bfloat16), w2_ref[...],
                preferred_element_type=jnp.float32)
    h = jnp.maximum(h.astype(ep) + b2_ref[...], 0)
    return h                             # (tb, hidden) in epilogue dtype


def _critic_kernel_packed(x_ref, w1_ref, b1_ref, w2_ref, b2_ref,
                          w3_ref, b3_ref, *out_refs):
    """Final layer as per-neuron VPU multiply + XLU lane reduction, each neuron
    written as a lane-dense (tb//128, 128) slab (unmasked full-width stores)."""
    h = _layers12(x_ref, w1_ref, b1_ref, w2_ref, b2_ref)
    w3 = w3_ref[...]                                        # (out_n, hidden) f32
    for j, o_ref in enumerate(out_refs):
        gb, lanes = o_ref.shape                             # (tb // 128, 128)
        col = jnp.sum(h * w3[j:j + 1, :], axis=-1) + b3_ref[j]   # (tb,) f32
        o_ref[...] = col.reshape(gb, lanes).astype(o_ref.dtype)


def _critic_kernel_plain(x_ref, w1_ref, b1_ref, w2_ref, b2_ref,
                         w3_ref, b3_ref, out_ref):
    """Straightforward (tb, out_n) output layout (validated fallback path)."""
    h = _layers12(x_ref, w1_ref, b1_ref, w2_ref, b2_ref)
    out = jnp.dot(h.astype(jnp.bfloat16), w3_ref[...],
                  preferred_element_type=jnp.float32) + b3_ref[...]
    out_ref[...] = out.astype(out_ref.dtype)


# ---------------------------------------------------------------------------
# Parameters
# ---------------------------------------------------------------------------

def init_critic_params(key, input_size, hidden_state, out_neurons):
    """PyTorch-Linear-style init (uniform +/- 1/sqrt(fan_in)); weights stored
    pre-transposed as (in, out), biases as (1, out), all f32."""
    def linear(k, fan_in, fan_out):
        kw, kb = jax.random.split(k)
        bound = 1.0 / jnp.sqrt(jnp.float32(fan_in))
        w = jax.random.uniform(kw, (fan_in, fan_out), jnp.float32, -bound, bound)
        b = jax.random.uniform(kb, (1, fan_out), jnp.float32, -bound, bound)
        return w, b

    k1, k2, k3 = jax.random.split(key, 3)
    w1, b1 = linear(k1, input_size, hidden_state)
    w2, b2 = linear(k2, hidden_state, hidden_state)
    w3, b3 = linear(k3, hidden_state, out_neurons)
    return w1, b1, w2, b2, w3, b3


def prepare_critic_params(params, epilogue_dtype=None):
    """One-time hoisted casts / layout prep (review: do NOT redo per call)."""
    if epilogue_dtype is None:
        epilogue_dtype = _epilogue_dtype()
    w1, b1, w2, b2, w3, b3 = params
    return {
        "epilogue_dtype": epilogue_dtype,
        "w1": w1.astype(jnp.bfloat16),
        "b1": b1.astype(epilogue_dtype),
        "w2": w2.astype(jnp.bfloat16),
        "b2": b2.astype(epilogue_dtype),
        # packed path: w3 rows stay f32 (consumed by the VPU), b3 flat in SMEM
        "w3_rows": jnp.asarray(w3.T, jnp.float32),
        "b3_flat": jnp.asarray(b3.reshape(-1), jnp.float32),
        # plain fallback path: bf16 MXU final layer
        "w3": w3.astype(jnp.bfloat16),
        "b3": b3.astype(jnp.float32),
        "dims": (w1.shape[0], w1.shape[1], w3.shape[1]),   # (in, hidden, out)
    }


# ---------------------------------------------------------------------------
# Forward wrapper
# ---------------------------------------------------------------------------

def _choose_batch_tile(batch, batch_tile):
    if batch <= 256:
        return 128
    # >= 2 grid steps so the "parallel" batch axis can use both v7x TensorCores.
    tb = min(_round_up(batch_tile, 128), _round_up(pl.cdiv(batch, 2), 128))
    if tb >= 1024:
        tb = (tb // 1024) * 1024     # multiple of 1024 enables the packed output
    return max(tb, 128)


_PACKED_OUTPUT_SUPPORTED = True      # flipped to False if Mosaic rejects the layout


def critic_forward(obs, prepared, *, batch_tile=2048):
    """obs: (batch, input_size) f32 or bf16.  prepared: prepare_critic_params().
    Returns (batch, out_neurons) f32."""
    global _PACKED_OUTPUT_SUPPORTED
    in_f, hidden, out_n = prepared["dims"]
    batch = obs.shape[0]
    assert obs.shape[1] == in_f

    tb = _choose_batch_tile(batch, batch_tile)
    rows = batch
    if rows < tb:                     # only tiny batches (< 128 rows): few KiB
        obs = jnp.pad(obs, ((0, tb - rows), (0, 0)))
        rows = tb
    grid = pl.cdiv(rows, tb)

    # VMEM budget: double-buffered obs/out tiles + resident weights + h1/h2
    # intermediates (f32 + bf16 copies, lane-padded), with headroom, clamped
    # well under the v7x 64 MiB physical limit.
    obs_bytes = jnp.dtype(obs.dtype).itemsize
    io_bytes = 2 * tb * in_f * obs_bytes + 2 * tb * out_n * 4
    w_bytes = 2 * (prepared["w1"].nbytes + prepared["w2"].nbytes
                   + prepared["w3"].nbytes + prepared["w3_rows"].nbytes
                   + prepared["b1"].nbytes + prepared["b2"].nbytes
                   + prepared["b3"].nbytes)
    inter_bytes = 3 * tb * max(hidden, 128) * 6
    vmem_limit = int(min(max(4 * (io_bytes + w_bytes + inter_bytes), 16 << 20),
                         48 << 20))

    flops = 2 * rows * (in_f * hidden + hidden * hidden + hidden * out_n)
    bytes_accessed = int(rows * in_f * obs_bytes + rows * out_n * 4 + w_bytes // 2)
    cparams = pltpu.CompilerParams(dimension_semantics=("parallel",),
                                   vmem_limit_bytes=vmem_limit)
    cost = pl.CostEstimate(flops=flops, transcendentals=0,
                           bytes_accessed=bytes_accessed)

    def resident(shape):              # same block every grid step -> no re-DMA
        return pl.BlockSpec(shape, lambda i: (0,) * len(shape))

    base_in_specs = [
        pl.BlockSpec((tb, in_f), lambda i: (i, 0)),          # obs tile over batch
        resident((in_f, hidden)), resident((1, hidden)),
        resident((hidden, hidden)), resident((1, hidden)),
    ]

    use_packed = (_PACKED_OUTPUT_SUPPORTED and out_n <= 16 and tb % 1024 == 0)
    if use_packed:
        row_blocks = tb // 128
        in_specs = base_in_specs + [
            resident((out_n, hidden)),                                  # w3 rows (f32)
            pl.BlockSpec(memory_space=pltpu.MemorySpace.SMEM),          # b3 scalars
        ]
        out_specs = [pl.BlockSpec((row_blocks, 128), lambda i: (i, 0))
                     for _ in range(out_n)]
        out_shape = [jax.ShapeDtypeStruct((grid * row_blocks, 128), jnp.float32)
                     for _ in range(out_n)]
        try:
            outs = pl.pallas_call(
                _critic_kernel_packed,
                grid=(grid,),
                in_specs=in_specs,
                out_specs=out_specs,
                out_shape=out_shape,
                compiler_params=cparams,
                cost_estimate=cost,
            )(obs, prepared["w1"], prepared["b1"], prepared["w2"],
              prepared["b2"], prepared["w3_rows"], prepared["b3_flat"])
            cols = [o.reshape(-1)[:batch] for o in outs]
            return cols[0][:, None] if out_n == 1 else jnp.stack(cols, axis=-1)
        except Exception:
            # Mosaic on this jax version rejected the lane-dense packed layout;
            # fall back to the straightforward (rows, out_n) layout below.
            _PACKED_OUTPUT_SUPPORTED = False

    in_specs = base_in_specs + [resident((hidden, out_n)), resident((1, out_n))]
    out = pl.pallas_call(
        _critic_kernel_plain,
        grid=(grid,),
        in_specs=in_specs,
        out_specs=pl.BlockSpec((tb, out_n), lambda i: (i, 0)),
        out_shape=jax.ShapeDtypeStruct((rows, out_n), jnp.float32),
        compiler_params=cparams,
        cost_estimate=cost,
    )(obs, prepared["w1"], prepared["b1"], prepared["w2"], prepared["b2"],
      prepared["w3"], prepared["b3"])
    return out[:batch]


# ---------------------------------------------------------------------------
# Pure-JAX references
# ---------------------------------------------------------------------------

def reference_forward_f32(obs, params):
    w1, b1, w2, b2, w3, b3 = params
    h1 = jnp.maximum(obs @ w1 + b1, 0.0)
    h2 = jnp.maximum(h1 @ w2 + b2, 0.0)
    return h2 @ w3 + b3


def reference_forward_mixed(obs, params, epilogue_dtype):
    """Mimics the kernel precision: bf16 MXU operands, f32 accumulation,
    epilogue-dtype bias+ReLU, ~f32 final projection."""
    w1, b1, w2, b2, w3, b3 = params
    x = obs.astype(jnp.bfloat16)
    h = jnp.dot(x, w1.astype(jnp.bfloat16), preferred_element_type=jnp.float32)
    h = jnp.maximum(h.astype(epilogue_dtype) + b1.astype(epilogue_dtype), 0)
    h = jnp.dot(h.astype(jnp.bfloat16), w2.astype(jnp.bfloat16),
                preferred_element_type=jnp.float32)
    h = jnp.maximum(h.astype(epilogue_dtype) + b2.astype(epilogue_dtype), 0)
    return jnp.dot(h.astype(jnp.float32), w3,
                   preferred_element_type=jnp.float32) + b3


if __name__ == "__main__":
    # Module hyper-params (constructor signature parity).
    input_size = 32
    state_size = 4        # unused by forward
    action_size = 4       # unused by forward
    hidden_state = 32

    key = jax.random.PRNGKey(0)
    k_p1, k_p2, k_obs = jax.random.split(key, 3)
    ep = _epilogue_dtype()

    # Case 1: default critic head (mediator_n=None -> out_neurons=1), small batch.
    params1 = init_critic_params(k_p1, input_size, hidden_state, 1)
    prep1 = prepare_critic_params(params1, ep)
    obs1 = jax.random.normal(k_obs, (256, input_size), jnp.float32)
    out1 = jax.block_until_ready(critic_forward(obs1, prep1))
    assert out1.shape == (256, 1)
    assert jnp.allclose(out1, reference_forward_mixed(obs1, params1, ep),
                        atol=2e-2, rtol=2e-2), "case1 mismatch vs mixed reference"
    assert jnp.allclose(out1, reference_forward_f32(obs1, params1),
                        atol=8e-2, rtol=8e-2), "case1 mismatch vs f32 reference"

    # Case 2: mediator head (mediator_n=4 -> out_neurons=4), ragged tiny batch
    # (exercises the small-batch pad and the (tb, out_n) output layout).
    params2 = init_critic_params(k_p2, input_size, hidden_state, 4)
    prep2 = prepare_critic_params(params2, ep)
    obs2 = jax.random.normal(jax.random.fold_in(k_obs, 1), (50, input_size),
                             jnp.float32)
    out2 = jax.block_until_ready(critic_forward(obs2, prep2))
    assert out2.shape == (50, 4)
    assert jnp.allclose(out2, reference_forward_mixed(obs2, params2, ep),
                        atol=2e-2, rtol=2e-2), "case2 mismatch vs mixed reference"
    assert jnp.allclose(out2, reference_forward_f32(obs2, params2),
                        atol=8e-2, rtol=8e-2), "case2 mismatch vs f32 reference"

    # Case 3: larger batch exercising 1024-row tiles, the >=2-step parallel grid
    # and the lane-dense packed output path (auto-falls back if it doesn't lower).
    obs3 = jax.random.normal(jax.random.fold_in(k_obs, 2), (2048, input_size),
                             jnp.float32)
    out3 = jax.block_until_ready(critic_forward(obs3, prep1))
    assert out3.shape == (2048, 1)
    assert jnp.allclose(out3, reference_forward_mixed(obs3, params1, ep),
                        atol=2e-2, rtol=2e-2), "case3 mismatch vs mixed reference"
    assert jnp.allclose(out3, reference_forward_f32(obs3, params1),
                        atol=8e-2, rtol=8e-2), "case3 mismatch vs f32 reference"

    print("KERNEL_OK")
</pallas_src>

<mosaic_0001>
module attributes {stable_mosaic.version = 11 : i64} {
  func.func @_critic_kernel_plain(%arg0: i32, %arg1: memref<128x32xf32, #tpu.memory_space<vmem>>, %arg2: memref<32x32xbf16, #tpu.memory_space<vmem>>, %arg3: memref<1x32xf32, #tpu.memory_space<vmem>>, %arg4: memref<32x32xbf16, #tpu.memory_space<vmem>>, %arg5: memref<1x32xf32, #tpu.memory_space<vmem>>, %arg6: memref<32x1xbf16, #tpu.memory_space<vmem>>, %arg7: memref<1x1xf32, #tpu.memory_space<vmem>>, %arg8: memref<128x1xf32, #tpu.memory_space<vmem>>) attributes {dimension_semantics = [#tpu.dimension_semantics<parallel>], iteration_bounds = array<i64: 2>, scalar_prefetch = 0 : i64, scratch_operands = 0 : i64, tpu.core_type = #tpu.core_type<tc>, window_params = [{transform_indices = @transform_0, window_bounds = array<i64: 128, 32>}, {pipeline_mode = #tpu.pipeline_mode<synchronous>, transform_indices = @transform_1, window_bounds = array<i64: 32, 32>}, {pipeline_mode = #tpu.pipeline_mode<synchronous>, transform_indices = @transform_2, window_bounds = array<i64: 1, 32>}, {pipeline_mode = #tpu.pipeline_mode<synchronous>, transform_indices = @transform_3, window_bounds = array<i64: 32, 32>}, {pipeline_mode = #tpu.pipeline_mode<synchronous>, transform_indices = @transform_4, window_bounds = array<i64: 1, 32>}, {pipeline_mode = #tpu.pipeline_mode<synchronous>, transform_indices = @transform_5, window_bounds = array<i64: 32, 1>}, {pipeline_mode = #tpu.pipeline_mode<synchronous>, transform_indices = @transform_6, window_bounds = array<i64: 1, 1>}, {transform_indices = @transform_7, window_bounds = array<i64: 128, 1>}]} {
    %c0 = arith.constant 0 : index
    %c0_0 = arith.constant 0 : index
    %0 = vector.load %arg1[%c0, %c0_0] : memref<128x32xf32, #tpu.memory_space<vmem>>, vector<128x32xf32>
    %1 = arith.truncf %0 : vector<128x32xf32> to vector<128x32xbf16>
    %c0_1 = arith.constant 0 : index
    %c0_2 = arith.constant 0 : index
    %2 = vector.load %arg2[%c0_1, %c0_2] : memref<32x32xbf16, #tpu.memory_space<vmem>>, vector<32x32xbf16>
    %cst = arith.constant dense<0.000000e+00> : vector<128x32xf32>
    %3 = tpu.matmul %1, %2, %cst {dimension_numbers = #tpu.dot_dimension_numbers<[1], [0], [0], [1], [0, 0, 1, 1], [], []>} : vector<128x32xbf16>, vector<32x32xbf16>, vector<128x32xf32> -> vector<128x32xf32>
    %c0_3 = arith.constant 0 : index
    %c0_4 = arith.constant 0 : index
    %4 = vector.load %arg3[%c0_3, %c0_4] : memref<1x32xf32, #tpu.memory_space<vmem>>, vector<1x32xf32>
    %5 = vector.broadcast %4 : vector<1x32xf32> to vector<128x32xf32>
    %6 = arith.addf %3, %5 : vector<128x32xf32>
    %cst_5 = arith.constant 0.000000e+00 : f32
    %7 = vector.broadcast %cst_5 : f32 to vector<128x32xf32>
    %8 = arith.maximumf %6, %7 : vector<128x32xf32>
    %9 = arith.truncf %8 : vector<128x32xf32> to vector<128x32xbf16>
    %c0_6 = arith.constant 0 : index
    %c0_7 = arith.constant 0 : index
    %10 = vector.load %arg4[%c0_6, %c0_7] : memref<32x32xbf16, #tpu.memory_space<vmem>>, vector<32x32xbf16>
    %cst_8 = arith.constant dense<0.000000e+00> : vector<128x32xf32>
    %11 = tpu.matmul %9, %10, %cst_8 {dimension_numbers = #tpu.dot_dimension_numbers<[1], [0], [0], [1], [0, 0, 1, 1], [], []>} : vector<128x32xbf16>, vector<32x32xbf16>, vector<128x32xf32> -> vector<128x32xf32>
    %c0_9 = arith.constant 0 : index
    %c0_10 = arith.constant 0 : index
    %12 = vector.load %arg5[%c0_9, %c0_10] : memref<1x32xf32, #tpu.memory_space<vmem>>, vector<1x32xf32>
    %13 = vector.broadcast %12 : vector<1x32xf32> to vector<128x32xf32>
    %14 = arith.addf %11, %13 : vector<128x32xf32>
    %cst_11 = arith.constant 0.000000e+00 : f32
    %15 = vector.broadcast %cst_11 : f32 to vector<128x32xf32>
    %16 = arith.maximumf %14, %15 : vector<128x32xf32>
    %17 = arith.truncf %16 : vector<128x32xf32> to vector<128x32xbf16>
    %c0_12 = arith.constant 0 : index
    %c0_13 = arith.constant 0 : index
    %18 = vector.load %arg6[%c0_12, %c0_13] : memref<32x1xbf16, #tpu.memory_space<vmem>>, vector<32x1xbf16>
    %cst_14 = arith.constant dense<0.000000e+00> : vector<128x1xf32>
    %19 = tpu.matmul %17, %18, %cst_14 {dimension_numbers = #tpu.dot_dimension_numbers<[1], [0], [0], [1], [0, 0, 1, 1], [], []>} : vector<128x32xbf16>, vector<32x1xbf16>, vector<128x1xf32> -> vector<128x1xf32>
    %c0_15 = arith.constant 0 : index
    %c0_16 = arith.constant 0 : index
    %20 = vector.load %arg7[%c0_15, %c0_16] : memref<1x1xf32, #tpu.memory_space<vmem>>, vector<1x1xf32>
    %21 = vector.broadcast %20 : vector<1x1xf32> to vector<128x1xf32>
    %22 = arith.addf %19, %21 : vector<128x1xf32>
    %c0_17 = arith.constant 0 : index
    %c0_18 = arith.constant 0 : index
    %23 = vector.load %arg8[%c0_17, %c0_18] : memref<128x1xf32, #tpu.memory_space<vmem>>, vector<128x1xf32>
    tpu.vector_store %arg8[%c0_17, %c0_18], %22 {strides = array<i32>} : memref<128x1xf32, #tpu.memory_space<vmem>>, vector<128x1xf32>,
    return
  }
  func.func @transform_0(%arg0: i32) -> (i32, i32) {
    %c0_i32 = arith.constant 0 : i32
    %c0_i32_0 = arith.constant 0 : i32
    return %arg0, %c0_i32 : i32, i32
  }
  func.func @transform_1(%arg0: i32) -> (i32, i32) {
    %c0_i32 = arith.constant 0 : i32
    %c0_i32_0 = arith.constant 0 : i32
    %c0_i32_1 = arith.constant 0 : i32
    return %c0_i32, %c0_i32_0 : i32, i32
  }
  func.func @transform_2(%arg0: i32) -> (i32, i32) {
    %c0_i32 = arith.constant 0 : i32
    %c0_i32_0 = arith.constant 0 : i32
    %c0_i32_1 = arith.constant 0 : i32
    return %c0_i32, %c0_i32_0 : i32, i32
  }
  func.func @transform_3(%arg0: i32) -> (i32, i32) {
    %c0_i32 = arith.constant 0 : i32
    %c0_i32_0 = arith.constant 0 : i32
    %c0_i32_1 = arith.constant 0 : i32
    return %c0_i32, %c0_i32_0 : i32, i32
  }
  func.func @transform_4(%arg0: i32) -> (i32, i32) {
    %c0_i32 = arith.constant 0 : i32
    %c0_i32_0 = arith.constant 0 : i32
    %c0_i32_1 = arith.constant 0 : i32
    return %c0_i32, %c0_i32_0 : i32, i32
  }
  func.func @transform_5(%arg0: i32) -> (i32, i32) {
    %c0_i32 = arith.constant 0 : i32
    %c0_i32_0 = arith.constant 0 : i32
    %c0_i32_1 = arith.constant 0 : i32
    return %c0_i32, %c0_i32_0 : i32, i32
  }
  func.func @transform_6(%arg0: i32) -> (i32, i32) {
    %c0_i32 = arith.constant 0 : i32
    %c0_i32_0 = arith.constant 0 : i32
    %c0_i32_1 = arith.constant 0 : i32
    return %c0_i32, %c0_i32_0 : i32, i32
  }
  func.func @transform_7(%arg0: i32) -> (i32, i32) {
    %c0_i32 = arith.constant 0 : i32
    %c0_i32_0 = arith.constant 0 : i32
    return %arg0, %c0_i32 : i32, i32
  }
}

</mosaic_0001>

<llo_original>
// kernel: tpu_custom_call.1
$region0: #{tpu_custom_call.1}
  #allocation0 [shape = 'u32[]', space=smem, size = 0x4, offset = 0x4, fixed_abs, tag = 'smem constant byte address 0x4 - core index']
  #allocation1 [shape = 'u32[144,128]{1,0:T(1,128)}', space=vmem, size = 0x12000, scoped, tag = 'internal scratch']
  #allocation2 [shape = 'f32[1,1]{1,0:T(1,128)S(1)}', space=vmem, size = 0x200, scoped, tag = 'scoped memory for tpu_custom_call.1']
  %s0 = inlined_call_operand.vmem [shape: f32[256,32], index: 0, kind: input, shape index: {}]
  %s1 = inlined_call_operand.vmem [shape: bf16[32,32], index: 1, kind: input, shape index: {}]
  %s2 = inlined_call_operand.vmem [shape: f32[1,32], index: 2, kind: input, shape index: {}]
  %s3 = inlined_call_operand.vmem [shape: bf16[32,32], index: 3, kind: input, shape index: {}]
  %s4 = inlined_call_operand.vmem [shape: f32[1,32], index: 4, kind: input, shape index: {}]
  %s5 = inlined_call_operand.vmem [shape: bf16[32,1], index: 5, kind: input, shape index: {}]
  %s6 = inlined_call_operand.<no memory space> [shape: f32[1,1], index: 6, kind: input, shape index: {}]
  %s7 = inlined_call_operand.vmem [shape: f32[256,1], index: 7, kind: output, shape index: {}]
  %s8 = sld [smem:[#allocation0]]
  $region61: #{tpu_custom_call.1} parent=0
    _
  %s10 = ssub.s32 1, %s8
  %s11 = scalar_select 0, %s10, %s8
  %v12 = vstv %s6
  %13 = vst [vmem:[#allocation2] sm:$0x1] %v12
  loop: start=0, step=1, limit=4
  $region2: #{tpu_custom_call.1} parent=0 // loop_pre_header
    _
  $region3: #{tpu_custom_call.1} parent=0 // loop_header
    %s15 = sphi 0, %s19
    %p16 = scmp.ge.s32.totalorder %s15, 4
    %s25 = sphi 0, %s27
    %s28 = sphi 0, %s25
    %s29 = sphi 0, %s28
    %s45 = sphi 0, %s29
    %s49 = sphi 0, %s49
    %s51 = sphi 0, %s49
    %s52 = sphi 0, %s51
    %s66 = sphi 0, %s52
    %s70 = sphi 0, %s70
    %s72 = sphi 0, %s70
    %s73 = sphi 0, %s72
    %s87 = sphi 0, %s73
    %s91 = sphi 0, %s91
    %s93 = sphi 0, %s91
    %s94 = sphi 0, %s93
    %s108 = sphi 0, %s94
    %s112 = sphi 0, %s112
    %s114 = sphi 0, %s112
    %s115 = sphi 0, %s114
    %s129 = sphi 0, %s115
    %s133 = sphi 0, %s133
    %s135 = sphi 0, %s133
    %s136 = sphi 0, %s135
    %s150 = sphi 0, %s136
    %s154 = sphi 0, %s154
    %s156 = sphi 0, %s154
    %s157 = sphi 0, %s156
    %s171 = sphi 0, %s157
    %s177 = sphi 0, %s179
    %s180 = sphi 0, %s177
    %s181 = sphi 0, %s180
    %s197 = sphi 0, %s181
  $region4: #{tpu_custom_call.1} parent=0 // loop_header_branch
    %18 = sbr.rel (%p16) target = $region8
  $region5: #{tpu_custom_call.1} parent=0 // loop_body
    %s20 = ssub.s32 %s15, 1
    %s21 = ssub.s32 %s15, 2
    %s22 = sadd.s32 %s15, 1
    %s23 = ssub.s32 %s15, %s22
    %p24 = scmp.eq.s32.totalorder %s23, 0
    %s26 = sadd.s32 %s25, 1
    %s27 = scalar_select %p24, %s25, %s26
    %p30 = pneg %p24
    %p31 = scmp.eq.s32.totalorder %s15, 1
    %p32 = por %p30, %p31
    %p33 = scmp.ne.s32.totalorder %s25, %s28
    %p34 = scmp.eq.s32.totalorder %s15, 0
    %p35 = por %p33, %p34
    %p36 = scmp.ne.s32.totalorder %s25, %s28
    %p37 = scmp.eq.s32.totalorder %s20, 1
    %p38 = por %p36, %p37
    %p39 = scmp.ne.s32.totalorder %s28, %s29
    %p40 = scmp.eq.s32.totalorder %s20, 0
    %p41 = por %p39, %p40
    %p42 = scmp.ne.s32.totalorder %s28, %s29
    %p43 = scmp.eq.s32.totalorder %s21, 1
    %p44 = por %p42, %p43
    %p46 = scmp.ne.s32.totalorder %s29, %s45
    %p47 = scmp.eq.s32.totalorder %s21, 0
    %p48 = por %p46, %p47
    %s50 = sadd.s32 %s49, 1
    %p53 = scmp.eq.s32.totalorder %s15, 1
    %p54 = scmp.ne.s32.totalorder %s49, %s51
    %p55 = scmp.eq.s32.totalorder %s15, 0
    %p56 = por %p54, %p55
    %p57 = scmp.ne.s32.totalorder %s49, %s51
    %p58 = scmp.eq.s32.totalorder %s20, 1
    %p59 = por %p57, %p58
    %p60 = scmp.ne.s32.totalorder %s51, %s52
    %p61 = scmp.eq.s32.totalorder %s20, 0
    %p62 = por %p60, %p61
    %p63 = scmp.ne.s32.totalorder %s51, %s52
    %p64 = scmp.eq.s32.totalorder %s21, 1
    %p65 = por %p63, %p64
    %p67 = scmp.ne.s32.totalorder %s52, %s66
    %p68 = scmp.eq.s32.totalorder %s21, 0
    %p69 = por %p67, %p68
    %s71 = sadd.s32 %s70, 1
    %p74 = scmp.eq.s32.totalorder %s15, 1
    %p75 = scmp.ne.s32.totalorder %s70, %s72
    %p76 = scmp.eq.s32.totalorder %s15, 0
    %p77 = por %p75, %p76
    %p78 = scmp.ne.s32.totalorder %s70, %s72
    %p79 = scmp.eq.s32.totalorder %s20, 1
    %p80 = por %p78, %p79
    %p81 = scmp.ne.s32.totalorder %s72, %s73
    %p82 = scmp.eq.s32.totalorder %s20, 0
    %p83 = por %p81, %p82
    %p84 = scmp.ne.s32.totalorder %s72, %s73
    %p85 = scmp.eq.s32.totalorder %s21, 1
    %p86 = por %p84, %p85
    %p88 = scmp.ne.s32.totalorder %s73, %s87
    %p89 = scmp.eq.s32.totalorder %s21, 0
    %p90 = por %p88, %p89
    %s92 = sadd.s32 %s91, 1
    %p95 = scmp.eq.s32.totalorder %s15, 1
    %p96 = scmp.ne.s32.totalorder %s91, %s93
    %p97 = scmp.eq.s32.totalorder %s15, 0
    %p98 = por %p96, %p97
    %p99 = scmp.ne.s32.totalorder %s91, %s93
    %p100 = scmp.eq.s32.totalorder %s20, 1
    %p101 = por %p99, %p100
    %p102 = scmp.ne.s32.totalorder %s93, %s94
    %p103 = scmp.eq.s32.totalorder %s20, 0
    %p104 = por %p102, %p103
    %p105 = scmp.ne.s32.totalorder %s93, %s94
    %p106 = scmp.eq.s32.totalorder %s21, 1
    %p107 = por %p105, %p106
    %p109 = scmp.ne.s32.totalorder %s94, %s108
    %p110 = scmp.eq.s32.totalorder %s21, 0
    %p111 = por %p109, %p110
    %s113 = sadd.s32 %s112, 1
    %p116 = scmp.eq.s32.totalorder %s15, 1
    %p117 = scmp.ne.s32.totalorder %s112, %s114
    %p118 = scmp.eq.s32.totalorder %s15, 0
    %p119 = por %p117, %p118
    %p120 = scmp.ne.s32.totalorder %s112, %s114
    %p121 = scmp.eq.s32.totalorder %s20, 1
    %p122 = por %p120, %p121
    %p123 = scmp.ne.s32.totalorder %s114, %s115
    %p124 = scmp.eq.s32.totalorder %s20, 0
    %p125 = por %p123, %p124
    %p126 = scmp.ne.s32.totalorder %s114, %s115
    %p127 = scmp.eq.s32.totalorder %s21, 1
    %p128 = por %p126, %p127
    %p130 = scmp.ne.s32.totalorder %s115, %s129
    %p131 = scmp.eq.s32.totalorder %s21, 0
    %p132 = por %p130, %p131
    %s134 = sadd.s32 %s133, 1
    %p137 = scmp.eq.s32.totalorder %s15, 1
    %p138 = scmp.ne.s32.totalorder %s133, %s135
    %p139 = scmp.eq.s32.totalorder %s15, 0
    %p140 = por %p138, %p139
    %p141 = scmp.ne.s32.totalorder %s133, %s135
    %p142 = scmp.eq.s32.totalorder %s20, 1
    %p143 = por %p141, %p142
    %p144 = scmp.ne.s32.totalorder %s135, %s136
    %p145 = scmp.eq.s32.totalorder %s20, 0
    %p146 = por %p144, %p145
    %p147 = scmp.ne.s32.totalorder %s135, %s136
    %p148 = scmp.eq.s32.totalorder %s21, 1
    %p149 = por %p147, %p148
    %p151 = scmp.ne.s32.totalorder %s136, %s150
    %p152 = scmp.eq.s32.totalorder %s21, 0
    %p153 = por %p151, %p152
    %s155 = sadd.s32 %s154, 1
    %p158 = scmp.eq.s32.totalorder %s15, 1
    %p159 = scmp.ne.s32.totalorder %s154, %s156
    %p160 = scmp.eq.s32.totalorder %s15, 0
    %p161 = por %p159, %p160
    %p162 = scmp.ne.s32.totalorder %s154, %s156
    %p163 = scmp.eq.s32.totalorder %s20, 1
    %p164 = por %p162, %p163
    %p165 = scmp.ne.s32.totalorder %s156, %s157
    %p166 = scmp.eq.s32.totalorder %s20, 0
    %p167 = por %p165, %p166
    %p168 = scmp.ne.s32.totalorder %s156, %s157
    %p169 = scmp.eq.s32.totalorder %s21, 1
    %p170 = por %p168, %p169
    %p172 = scmp.ne.s32.totalorder %s157, %s171
    %p173 = scmp.eq.s32.totalorder %s21, 0
    %p174 = por %p172, %p173
    %s175 = ssub.s32 %s15, %s22
    %p176 = scmp.eq.s32.totalorder %s175, 0
    %s178 = sadd.s32 %s177, 1
    %s179 = scalar_select %p176, %s177, %s178
    %p182 = pneg %p176
    %p183 = scmp.eq.s32.totalorder %s15, 1
    %p184 = por %p182, %p183
    %p185 = scmp.ne.s32.totalorder %s177, %s180
    %p186 = scmp.eq.s32.totalorder %s15, 0
    %p187 = por %p185, %p186
    %p188 = scmp.ne.s32.totalorder %s177, %s180
    %p189 = scmp.eq.s32.totalorder %s20, 1
    %p190 = por %p188, %p189
    %p191 = scmp.ne.s32.totalorder %s180, %s181
    %p192 = scmp.eq.s32.totalorder %s20, 0
    %p193 = por %p191, %p192
    %p194 = scmp.ne.s32.totalorder %s180, %s181
    %p195 = scmp.eq.s32.totalorder %s21, 1
    %p196 = por %p194, %p195
    %p198 = scmp.ne.s32.totalorder %s181, %s197
    %p199 = scmp.eq.s32.totalorder %s21, 0
    %p200 = por %p198, %p199
    %p201 = scmp.le.s32.totalorder 1, %s15
    %p202 = scmp.lt.s32.totalorder %s15, 3
    %p203 = pnand %p201, %p202
    %p204 = pneg %p203
    // Predicated region
    $region9: #{tpu_custom_call.1} parent=5 // pred_check
      _
    $region10: #{tpu_custom_call.1} parent=5 // pred_check_branch
      %206 = sbr.rel (%p203) target = $region12
    $region11: #{tpu_custom_call.1} parent=5 // pred_region
      %s207 = ssub.s32 %s15, 1
      // Predicated region
      $region13: #{tpu_custom_call.1} parent=11 // pred_check
        %p208 = pneg %p62
      $region14: #{tpu_custom_call.1} parent=11 // pred_check_branch
        %210 = sbr.rel (%p208) target = $region16
      $region15: #{tpu_custom_call.1} parent=11 // pred_region
        _
      $region16: #{tpu_custom_call.1} parent=11 // pred_fallthru
        _
      // Predicated region
      $region17: #{tpu_custom_call.1} parent=11 // pred_check
        %p211 = pneg %p83
      $region18: #{tpu_custom_call.1} parent=11 // pred_check_branch
        %213 = sbr.rel (%p211) target = $region20
      $region19: #{tpu_custom_call.1} parent=11 // pred_region
        _
      $region20: #{tpu_custom_call.1} parent=11 // pred_fallthru
        _
      // Predicated region
      $region21: #{tpu_custom_call.1} parent=11 // pred_check
        %p214 = pneg %p104
      $region22: #{tpu_custom_call.1} parent=11 // pred_check_branch
        %216 = sbr.rel (%p214) target = $region24
      $region23: #{tpu_custom_call.1} parent=11 // pred_region
        _
      $region24: #{tpu_custom_call.1} parent=11 // pred_fallthru
        _
      // Predicated region
      $region25: #{tpu_custom_call.1} parent=11 // pred_check
        %p217 = pneg %p125
      $region26: #{tpu_custom_call.1} parent=11 // pred_check_branch
        %219 = sbr.rel (%p217) target = $region28
      $region27: #{tpu_custom_call.1} parent=11 // pred_region
        _
      $region28: #{tpu_custom_call.1} parent=11 // pred_fallthru
        _
      // Predicated region
      $region29: #{tpu_custom_call.1} parent=11 // pred_check
        %p220 = pneg %p146
      $region30: #{tpu_custom_call.1} parent=11 // pred_check_branch
        %222 = sbr.rel (%p220) target = $region32
      $region31: #{tpu_custom_call.1} parent=11 // pred_region
        _
      $region32: #{tpu_custom_call.1} parent=11 // pred_fallthru
        _
      // Predicated region
      $region33: #{tpu_custom_call.1} parent=11 // pred_check
        %p223 = pneg %p167
      $region34: #{tpu_custom_call.1} parent=11 // pred_check_branch
        %225 = sbr.rel (%p223) target = $region36
      $region35: #{tpu_custom_call.1} parent=11 // pred_region
        _
      $region36: #{tpu_custom_call.1} parent=11 // pred_fallthru
        _
    $region12: #{tpu_custom_call.1} parent=5 // pred_fallthru
      _
    %p226 = scmp.lt.s32.totalorder %s15, 2
    // Predicated region
    $region37: #{tpu_custom_call.1} parent=5 // pred_check
      %p227 = pneg %p226
    $region38: #{tpu_custom_call.1} parent=5 // pred_check_branch
      %229 = sbr.rel (%p227) target = $region40
    $region39: #{tpu_custom_call.1} parent=5 // pred_region
      // Predicated region
      $region41: #{tpu_custom_call.1} parent=39 // pred_check
        %p230 = pneg %p35
      $region42: #{tpu_custom_call.1} parent=39 // pred_check_branch
        %232 = sbr.rel (%p230) target = $region44
      $region43: #{tpu_custom_call.1} parent=39 // pred_region
        %s233 = smul.u32 16, %s15
        %p234 = scmp.lt.s32.totalorder %s233, 31
        %s235 = scalar_select %p234, %s233, 31
        %s236 = smul.addr %s235, 8
        %s237 = scalar_lea.vmem %s0, %s236
        %s238 = smul.u32 16, %s15
      $region44: #{tpu_custom_call.1} parent=39 // pred_fallthru
        _
    $region40: #{tpu_custom_call.1} parent=5 // pred_fallthru
      _
    %p239 = scmp.le.s32.totalorder 1, %s15
    %p240 = scmp.lt.s32.totalorder %s15, 3
    %p241 = pnand %p239, %p240
    %p242 = pneg %p241
    // Predicated region
    $region45: #{tpu_custom_call.1} parent=5 // pred_check
      _
    $region46: #{tpu_custom_call.1} parent=5 // pred_check_branch
      %244 = sbr.rel (%p241) target = $region48
    $region47: #{tpu_custom_call.1} parent=5 // pred_region
      %s245 = ssub.s32 %s15, 1
      %s246 = smul.u32 16, %s20
      %p247 = scmp.lt.s32.totalorder %s246, 31
      %s248 = scalar_select %p247, %s246, 31
      %s249 = smul.addr %s248, 8
      %s250 = scalar_lea.vmem %s0, %s249
      %p251 = pneg %p41
      %p252 = pneg %p38
      %p253 = pneg %p62
      %p254 = pneg %p59
      %p255 = pneg %p83
      %p256 = pneg %p80
      %p257 = pneg %p104
      %p258 = pneg %p101
      %p259 = pneg %p125
      %p260 = pneg %p122
      %p261 = pneg %p146
      %p262 = pneg %p143
      %p263 = pneg %p167
      %p264 = pneg %p164
      %p265 = pneg %p193
      %p266 = pneg %p190
      %s267 = smul.u32 16, %s20
      %p268 = scmp.lt.s32.totalorder %s267, 31
      %s269 = scalar_select %p268, %s267, 31
      %s270 = smul.addr %s269, 8
      %s271 = scalar_lea.vmem %s7, %s270
      %s272 = smul.u32 16, %s20
      %p273 = scmp.lt.s32.totalorder %s272, 31
      %s274 = scalar_select %p273, %s272, 31
      %s275 = smul.addr %s274, 8
      %s276 = scalar_lea.vmem %s0, %s275
      %s277 = smul.u32 16, %s20
      %s278 = smul.u32 16, %s20
      %p279 = scmp.lt.s32.totalorder %s278, 31
      %s280 = scalar_select %p279, %s278, 31
      %s281 = smul.addr %s280, 8
      %s282 = scalar_lea.vmem %s7, %s281
      %s283 = smul.u32 16, %s20
      %v285 = vld [vmem:[%s276] sm:$0xff]
      %v286 = vld [vmem:[%s276 + $0x8] sm:$0xff]
      %v287 = vld [vmem:[%s276 + $0x10] sm:$0xff]
      %v288 = vld [vmem:[%s276 + $0x18] sm:$0xff]
      %v289 = vld [vmem:[%s276 + $0x20] sm:$0xff]
      %v290 = vld [vmem:[%s276 + $0x28] sm:$0xff]
      %v291 = vld [vmem:[%s276 + $0x30] sm:$0xff]
      %v292 = vld [vmem:[%s276 + $0x38] sm:$0xff]
      %v293 = vld [vmem:[%s276 + $0x40] sm:$0xff]
      %v294 = vld [vmem:[%s276 + $0x48] sm:$0xff]
      %v295 = vld [vmem:[%s276 + $0x50] sm:$0xff]
      %v296 = vld [vmem:[%s276 + $0x58] sm:$0xff]
      %v297 = vld [vmem:[%s276 + $0x60] sm:$0xff]
      %v298 = vld [vmem:[%s276 + $0x68] sm:$0xff]
      %v299 = vld [vmem:[%s276 + $0x70] sm:$0xff]
      %v300 = vld [vmem:[%s276 + $0x78] sm:$0xff]
      %v301 = vpack.c.bf16 %v286, %v285
      %v302 = vpack.c.bf16 %v288, %v287
      %v303 = vpack.c.bf16 %v290, %v289
      %v304 = vpack.c.bf16 %v292, %v291
      %v305 = vpack.c.bf16 %v294, %v293
      %v306 = vpack.c.bf16 %v296, %v295
      %v307 = vpack.c.bf16 %v298, %v297
      %v308 = vpack.c.bf16 %v300, %v299
      %v309 = vld [vmem:[%s1] sm:$0xf]
      %v310 = vld [vmem:[%s1 + $0x4] sm:$0xf]
      %v311 = vld [vmem:[%s1 + $0x8] sm:$0xf]
      %v312 = vld [vmem:[%s1 + $0xc] sm:$0xf]
      %v313 = vld [vmem:[%s2] sm:$0x1]
      %v315 = vlaneseq
      %v316 = vshrl.u32 %v315, 7
      %v317 = vsub.s32 0, %v316
      %v318 = vrot.slane %v313, %v317
      %v324 = vunpack.c.l.b16 %v309
      %v325 = vunpack.c.l.b16 %v310
      %v326 = vunpack.c.l.b16 %v311
      %v327 = vunpack.c.l.b16 %v312
      %v328 = vpack.c.b16 %v325, %v324
      %v329 = vpack.c.b16 %v327, %v326
      %vm332 = vcmask 261120
      %v334 = vsel %vm332, %v301, 0
      %v337 = vsel %vm332, %v302, 0
      %v340 = vsel %vm332, %v303, 0
      %v343 = vsel %vm332, %v304, 0
      %v346 = vsel %vm332, %v305, 0
      %v349 = vsel %vm332, %v306, 0
      %v352 = vsel %vm332, %v307, 0
      %v355 = vsel %vm332, %v308, 0
      %357 = vmatprep.subr.bf16.mxu0 0
      %358 = vmatpush1.bf16.msra.mxu0 0
      %359 = vmatprep.subr.bf16.mxu0 0
      %360 = vmatpush1.bf16.msra.mxu0 0
      %361 = vmatprep.subr.bf16.mxu0 0
      %362 = vmatpush1.bf16.msra.mxu0 0
      %363 = vmatprep.subr.bf16.mxu0 0
      %364 = vmatpush1.bf16.msra.mxu0 0
      %365 = vmatprep.subr.bf16.mxu0 0
      %366 = vmatpush1.bf16.msra.mxu0 0
      %367 = vmatprep.subr.bf16.mxu0 0
      %368 = vmatpush1.bf16.msra.mxu0 0
      %369 = vmatprep.subr.bf16.mxu0 0
      %370 = vmatpush1.bf16.msra.mxu0 %v329
      %371 = vmatprep.subr.bf16.mxu0 0
      %372 = vmatpush1.bf16.msra.mxu0 %v328
      %373 = vmatprep.subr.bf16.mxu0 0
      %374 = vmatpush2.bf16.msra.mxu0 0
      %375 = vmatprep.subr.bf16.mxu0 0
      %376 = vmatpush2.bf16.msra.mxu0 0
      %377 = vmatprep.subr.bf16.mxu0 0
      %378 = vmatpush2.bf16.msra.mxu0 0
      %379 = vmatprep.subr.bf16.mxu0 0
      %380 = vmatpush2.bf16.msra.mxu0 0
      %381 = vmatprep.subr.bf16.mxu0 0
      %382 = vmatpush2.bf16.msra.mxu0 0
      %383 = vmatprep.subr.bf16.mxu0 0
      %384 = vmatpush2.bf16.msra.mxu0 0
      %385 = vmatprep.subr.bf16.mxu0 0
      %386 = vmatpush2.bf16.msra.mxu0 0
      %387 = vmatprep.subr.bf16.mxu0 0
      %388 = vmatpush2.bf16.msra.mxu0 0
      %389 = vmatprep.mubr.bf16.mxu0 0
      %390 = vmatmul.mubr.bf16.gmra.mxu0 %v334
      %v391 = vpop.f32.mrf.mxu0
      %v392 = vadd.f32 %v318, %v391
      %v393 = vpop.f32.mrf.mxu0
      %v394 = vpop.f32.mrf.mxu0
      %v395 = vadd.f32 %v318, %v394
      %v396 = vpop.f32.mrf.mxu0
      %397 = vmatprep.mubr.bf16.mxu0 0
      %398 = vmatmul.mubr.bf16.gmra.mxu0 %v337
      %v399 = vpop.f32.mrf.mxu0
      %v400 = vadd.f32 %v318, %v399
      %v401 = vpop.f32.mrf.mxu0
      %v402 = vpop.f32.mrf.mxu0
      %v403 = vadd.f32 %v318, %v402
      %v404 = vpop.f32.mrf.mxu0
      %405 = vmatprep.mubr.bf16.mxu0 0
      %406 = vmatmul.mubr.bf16.gmra.mxu0 %v340
      %v407 = vpop.f32.mrf.mxu0
      %v408 = vadd.f32 %v318, %v407
      %v409 = vpop.f32.mrf.mxu0
      %v410 = vpop.f32.mrf.mxu0
      %v411 = vadd.f32 %v318, %v410
      %v412 = vpop.f32.mrf.mxu0
      %413 = vmatprep.mubr.bf16.mxu0 0
      %414 = vmatmul.mubr.bf16.gmra.mxu0 %v343
      %v415 = vpop.f32.mrf.mxu0
      %v416 = vadd.f32 %v318, %v415
      %v417 = vpop.f32.mrf.mxu0
      %v418 = vpop.f32.mrf.mxu0
      %v419 = vadd.f32 %v318, %v418
      %v420 = vpop.f32.mrf.mxu0
      %421 = vmatprep.mubr.bf16.mxu0 0
      %422 = vmatmul.mubr.bf16.gmra.mxu0 %v346
      %v423 = vpop.f32.mrf.mxu0
      %v424 = vadd.f32 %v318, %v423
      %v425 = vpop.f32.mrf.mxu0
      %v426 = vpop.f32.mrf.mxu0
      %v427 = vadd.f32 %v318, %v426
      %v428 = vpop.f32.mrf.mxu0
      %429 = vmatprep.mubr.bf16.mxu0 0
      %430 = vmatmul.mubr.bf16.gmra.mxu0 %v349
      %v431 = vpop.f32.mrf.mxu0
      %v432 = vadd.f32 %v318, %v431
      %v433 = vpop.f32.mrf.mxu0
      %v434 = vpop.f32.mrf.mxu0
      %v435 = vadd.f32 %v318, %v434
      %v436 = vpop.f32.mrf.mxu0
      %437 = vmatprep.mubr.bf16.mxu0 0
      %438 = vmatmul.mubr.bf16.gmra.mxu0 %v352
      %v439 = vpop.f32.mrf.mxu0
      %v440 = vadd.f32 %v318, %v439
      %v441 = vpop.f32.mrf.mxu0
      %v442 = vpop.f32.mrf.mxu0
      %v443 = vadd.f32 %v318, %v442
      %v444 = vpop.f32.mrf.mxu0
      %445 = vmatprep.mubr.bf16.mxu0 0
      %446 = vmatmul.mubr.bf16.gmra.mxu0 %v355
      %v447 = vpop.f32.mrf.mxu0
      %v448 = vadd.f32 %v318, %v447
      %v449 = vpop.f32.mrf.mxu0
      %v450 = vpop.f32.mrf.mxu0
      %v451 = vadd.f32 %v318, %v450
      %v452 = vpop.f32.mrf.mxu0
      %453 = vdwg.mxu0
      %v454 = vmax.f32 %v392, 0.0
      %v455 = vmax.f32 %v395, 0.0
      %v456 = vmax.f32 %v400, 0.0
      %v457 = vmax.f32 %v403, 0.0
      %v458 = vmax.f32 %v408, 0.0
      %v459 = vmax.f32 %v411, 0.0
      %v460 = vmax.f32 %v416, 0.0
      %v461 = vmax.f32 %v419, 0.0
      %v462 = vmax.f32 %v424, 0.0
      %v463 = vmax.f32 %v427, 0.0
      %v464 = vmax.f32 %v432, 0.0
      %v465 = vmax.f32 %v435, 0.0
      %v466 = vmax.f32 %v440, 0.0
      %v467 = vmax.f32 %v443, 0.0
      %v468 = vmax.f32 %v448, 0.0
      %v469 = vmax.f32 %v451, 0.0
      %v470 = vpack.c.bf16 %v455, %v454
      %v471 = vpack.c.bf16 %v457, %v456
      %v472 = vpack.c.bf16 %v459, %v458
      %v473 = vpack.c.bf16 %v461, %v460
      %v474 = vpack.c.bf16 %v463, %v462
      %v475 = vpack.c.bf16 %v465, %v464
      %v476 = vpack.c.bf16 %v467, %v466
      %v477 = vpack.c.bf16 %v469, %v468
      %v478 = vld [vmem:[%s3] sm:$0xf]
      %v479 = vld [vmem:[%s3 + $0x4] sm:$0xf]
      %v480 = vld [vmem:[%s3 + $0x8] sm:$0xf]
      %v481 = vld [vmem:[%s3 + $0xc] sm:$0xf]
      %v482 = vld [vmem:[%s4] sm:$0x1]
      %v484 = vlaneseq
      %v485 = vshrl.u32 %v484, 7
      %v486 = vsub.s32 0, %v485
      %v487 = vrot.slane %v482, %v486
      %v493 = vunpack.c.l.b16 %v478
      %v494 = vunpack.c.l.b16 %v479
      %v495 = vunpack.c.l.b16 %v480
      %v496 = vunpack.c.l.b16 %v481
      %v497 = vpack.c.b16 %v494, %v493
      %v498 = vpack.c.b16 %v496, %v495
      %v502 = vsel %vm332, %v470, 0
      %v505 = vsel %vm332, %v471, 0
      %v508 = vsel %vm332, %v472, 0
      %v511 = vsel %vm332, %v473, 0
      %v514 = vsel %vm332, %v474, 0
      %v517 = vsel %vm332, %v475, 0
      %v520 = vsel %vm332, %v476, 0
      %v523 = vsel %vm332, %v477, 0
      %525 = vmatprep.subr.bf16.mxu0 0
      %526 = vmatpush1.bf16.msra.mxu0 0
      %527 = vmatprep.subr.bf16.mxu0 0
      %528 = vmatpush1.bf16.msra.mxu0 0
      %529 = vmatprep.subr.bf16.mxu0 0
      %530 = vmatpush1.bf16.msra.mxu0 0
      %531 = vmatprep.subr.bf16.mxu0 0
      %532 = vmatpush1.bf16.msra.mxu0 0
      %533 = vmatprep.subr.bf16.mxu0 0
      %534 = vmatpush1.bf16.msra.mxu0 0
      %535 = vmatprep.subr.bf16.mxu0 0
      %536 = vmatpush1.bf16.msra.mxu0 0
      %537 = vmatprep.subr.bf16.mxu0 0
      %538 = vmatpush1.bf16.msra.mxu0 %v498
      %539 = vmatprep.subr.bf16.mxu0 0
      %540 = vmatpush1.bf16.msra.mxu0 %v497
      %541 = vmatprep.subr.bf16.mxu0 0
      %542 = vmatpush2.bf16.msra.mxu0 0
      %543 = vmatprep.subr.bf16.mxu0 0
      %544 = vmatpush2.bf16.msra.mxu0 0
      %545 = vmatprep.subr.bf16.mxu0 0
      %546 = vmatpush2.bf16.msra.mxu0 0
      %547 = vmatprep.subr.bf16.mxu0 0
      %548 = vmatpush2.bf16.msra.mxu0 0
      %549 = vmatprep.subr.bf16.mxu0 0
      %550 = vmatpush2.bf16.msra.mxu0 0
      %551 = vmatprep.subr.bf16.mxu0 0
      %552 = vmatpush2.bf16.msra.mxu0 0
      %553 = vmatprep.subr.bf16.mxu0 0
      %554 = vmatpush2.bf16.msra.mxu0 0
      %555 = vmatprep.subr.bf16.mxu0 0
      %556 = vmatpush2.bf16.msra.mxu0 0
      %557 = vmatprep.mubr.bf16.mxu0 0
      %558 = vmatmul.mubr.bf16.gmra.mxu0 %v502
      %v559 = vpop.f32.mrf.mxu0
      %v560 = vadd.f32 %v487, %v559
      %v561 = vpop.f32.mrf.mxu0
      %v562 = vpop.f32.mrf.mxu0
      %v563 = vadd.f32 %v487, %v562
      %v564 = vpop.f32.mrf.mxu0
      %565 = vmatprep.mubr.bf16.mxu0 0
      %566 = vmatmul.mubr.bf16.gmra.mxu0 %v505
      %v567 = vpop.f32.mrf.mxu0
      %v568 = vadd.f32 %v487, %v567
      %v569 = vpop.f32.mrf.mxu0
      %v570 = vpop.f32.mrf.mxu0
      %v571 = vadd.f32 %v487, %v570
      %v572 = vpop.f32.mrf.mxu0
      %573 = vmatprep.mubr.bf16.mxu0 0
      %574 = vmatmul.mubr.bf16.gmra.mxu0 %v508
      %v575 = vpop.f32.mrf.mxu0
      %v576 = vadd.f32 %v487, %v575
      %v577 = vpop.f32.mrf.mxu0
      %v578 = vpop.f32.mrf.mxu0
      %v579 = vadd.f32 %v487, %v578
      %v580 = vpop.f32.mrf.mxu0
      %581 = vmatprep.mubr.bf16.mxu0 0
      %582 = vmatmul.mubr.bf16.gmra.mxu0 %v511
      %v583 = vpop.f32.mrf.mxu0
      %v584 = vadd.f32 %v487, %v583
      %v585 = vpop.f32.mrf.mxu0
      %v586 = vpop.f32.mrf.mxu0
      %v587 = vadd.f32 %v487, %v586
      %v588 = vpop.f32.mrf.mxu0
      %589 = vmatprep.mubr.bf16.mxu0 0
      %590 = vmatmul.mubr.bf16.gmra.mxu0 %v514
      %v591 = vpop.f32.mrf.mxu0
      %v592 = vadd.f32 %v487, %v591
      %v593 = vpop.f32.mrf.mxu0
      %v594 = vpop.f32.mrf.mxu0
      %v595 = vadd.f32 %v487, %v594
      %v596 = vpop.f32.mrf.mxu0
      %597 = vmatprep.mubr.bf16.mxu0 0
      %598 = vmatmul.mubr.bf16.gmra.mxu0 %v517
      %v599 = vpop.f32.mrf.mxu0
      %v600 = vadd.f32 %v487, %v599
      %v601 = vpop.f32.mrf.mxu0
      %v602 = vpop.f32.mrf.mxu0
      %v603 = vadd.f32 %v487, %v602
      %v604 = vpop.f32.mrf.mxu0
      %605 = vmatprep.mubr.bf16.mxu0 0
      %606 = vmatmul.mubr.bf16.gmra.mxu0 %v520
      %v607 = vpop.f32.mrf.mxu0
      %v608 = vadd.f32 %v487, %v607
      %v609 = vpop.f32.mrf.mxu0
      %v610 = vpop.f32.mrf.mxu0
      %v611 = vadd.f32 %v487, %v610
      %v612 = vpop.f32.mrf.mxu0
      %613 = vmatprep.mubr.bf16.mxu0 0
      %614 = vmatmul.mubr.bf16.gmra.mxu0 %v523
      %v615 = vpop.f32.mrf.mxu0
      %v616 = vadd.f32 %v487, %v615
      %v617 = vpop.f32.mrf.mxu0
      %v618 = vpop.f32.mrf.mxu0
      %v619 = vadd.f32 %v487, %v618
      %v620 = vpop.f32.mrf.mxu0
      %621 = vdwg.mxu0
      %v622 = vmax.f32 %v560, 0.0
      %v623 = vmax.f32 %v563, 0.0
      %v624 = vmax.f32 %v568, 0.0
      %v625 = vmax.f32 %v571, 0.0
      %v626 = vmax.f32 %v576, 0.0
      %v627 = vmax.f32 %v579, 0.0
      %v628 = vmax.f32 %v584, 0.0
      %v629 = vmax.f32 %v587, 0.0
      %v630 = vmax.f32 %v592, 0.0
      %v631 = vmax.f32 %v595, 0.0
      %v632 = vmax.f32 %v600, 0.0
      %v633 = vmax.f32 %v603, 0.0
      %v634 = vmax.f32 %v608, 0.0
      %v635 = vmax.f32 %v611, 0.0
      %v636 = vmax.f32 %v616, 0.0
      %v637 = vmax.f32 %v619, 0.0
      %v638 = vpack.c.bf16 %v623, %v622
      %v639 = vpack.c.bf16 %v625, %v624
      %v640 = vpack.c.bf16 %v627, %v626
      %v641 = vpack.c.bf16 %v629, %v628
      %v642 = vpack.c.bf16 %v631, %v630
      %v643 = vpack.c.bf16 %v633, %v632
      %v644 = vpack.c.bf16 %v635, %v634
      %v645 = vpack.c.bf16 %v637, %v636
      %v646 = vld [vmem:[%s5] sm:$0xf]
      %v647 = vld [vmem:[%s5 + $0x4] sm:$0xf]
      %v648 = vld [vmem:[%s5 + $0x8] sm:$0xf]
      %v649 = vld [vmem:[%s5 + $0xc] sm:$0xf]
      %v650 = vld [vmem:[#allocation2] sm:$0x1]
      %v652 = vlaneseq
      %v653 = vshrl.u32 %v652, 7
      %v654 = vsub.s32 0, %v653
      %v655 = vrot.slane %v650, %v654
      %v661 = vunpack.c.l.b16 %v646
      %v662 = vunpack.c.l.b16 %v647
      %v663 = vunpack.c.l.b16 %v648
      %v664 = vunpack.c.l.b16 %v649
      %v665 = vpack.c.b16 %v662, %v661
      %v666 = vpack.c.b16 %v664, %v663
      %v670 = vsel %vm332, %v638, 0
      %v673 = vsel %vm332, %v639, 0
      %v676 = vsel %vm332, %v640, 0
      %v679 = vsel %vm332, %v641, 0
      %v682 = vsel %vm332, %v642, 0
      %v685 = vsel %vm332, %v643, 0
      %v688 = vsel %vm332, %v644, 0
      %v691 = vsel %vm332, %v645, 0
      %693 = vmatprep.subr.bf16.mxu0 0
      %694 = vmatpush1.bf16.msra.mxu0 0
      %695 = vmatprep.subr.bf16.mxu0 0
      %696 = vmatpush1.bf16.msra.mxu0 0
      %697 = vmatprep.subr.bf16.mxu0 0
      %698 = vmatpush1.bf16.msra.mxu0 0
      %699 = vmatprep.subr.bf16.mxu0 0
      %700 = vmatpush1.bf16.msra.mxu0 0
      %701 = vmatprep.subr.bf16.mxu0 0
      %702 = vmatpush1.bf16.msra.mxu0 0
      %703 = vmatprep.subr.bf16.mxu0 0
      %704 = vmatpush1.bf16.msra.mxu0 0
      %705 = vmatprep.subr.bf16.mxu0 0
      %706 = vmatpush1.bf16.msra.mxu0 %v666
      %707 = vmatprep.subr.bf16.mxu0 0
      %708 = vmatpush1.bf16.msra.mxu0 %v665
      %709 = vmatprep.subr.bf16.mxu0 0
      %710 = vmatpush2.bf16.msra.mxu0 0
      %711 = vmatprep.subr.bf16.mxu0 0
      %712 = vmatpush2.bf16.msra.mxu0 0
      %713 = vmatprep.subr.bf16.mxu0 0
      %714 = vmatpush2.bf16.msra.mxu0 0
      %715 = vmatprep.subr.bf16.mxu0 0
      %716 = vmatpush2.bf16.msra.mxu0 0
      %717 = vmatprep.subr.bf16.mxu0 0
      %718 = vmatpush2.bf16.msra.mxu0 0
      %719 = vmatprep.subr.bf16.mxu0 0
      %720 = vmatpush2.bf16.msra.mxu0 0
      %721 = vmatprep.subr.bf16.mxu0 0
      %722 = vmatpush2.bf16.msra.mxu0 0
      %723 = vmatprep.subr.bf16.mxu0 0
      %724 = vmatpush2.bf16.msra.mxu0 0
      %725 = vmatprep.mubr.bf16.mxu0 0
      %726 = vmatmul.mubr.bf16.gmra.mxu0 %v670
      %v727 = vpop.f32.mrf.mxu0
      %v728 = vadd.f32 %v655, %v727
      %v729 = vpop.f32.mrf.mxu0
      %v730 = vpop.f32.mrf.mxu0
      %v731 = vadd.f32 %v655, %v730
      %v732 = vpop.f32.mrf.mxu0
      %733 = vmatprep.mubr.bf16.mxu0 0
      %734 = vmatmul.mubr.bf16.gmra.mxu0 %v673
      %v735 = vpop.f32.mrf.mxu0
      %v736 = vadd.f32 %v655, %v735
      %v737 = vpop.f32.mrf.mxu0
      %v738 = vpop.f32.mrf.mxu0
      %v739 = vadd.f32 %v655, %v738
      %v740 = vpop.f32.mrf.mxu0
      %741 = vmatprep.mubr.bf16.mxu0 0
      %742 = vmatmul.mubr.bf16.gmra.mxu0 %v676
      %v743 = vpop.f32.mrf.mxu0
      %v744 = vadd.f32 %v655, %v743
      %v745 = vpop.f32.mrf.mxu0
      %v746 = vpop.f32.mrf.mxu0
      %v747 = vadd.f32 %v655, %v746
      %v748 = vpop.f32.mrf.mxu0
      %749 = vmatprep.mubr.bf16.mxu0 0
      %750 = vmatmul.mubr.bf16.gmra.mxu0 %v679
      %v751 = vpop.f32.mrf.mxu0
      %v752 = vadd.f32 %v655, %v751
      %v753 = vpop.f32.mrf.mxu0
      %v754 = vpop.f32.mrf.mxu0
      %v755 = vadd.f32 %v655, %v754
      %v756 = vpop.f32.mrf.mxu0
      %757 = vmatprep.mubr.bf16.mxu0 0
      %758 = vmatmul.mubr.bf16.gmra.mxu0 %v682
      %v759 = vpop.f32.mrf.mxu0
      %v760 = vadd.f32 %v655, %v759
      %v761 = vpop.f32.mrf.mxu0
      %v762 = vpop.f32.mrf.mxu0
      %v763 = vadd.f32 %v655, %v762
      %v764 = vpop.f32.mrf.mxu0
      %765 = vmatprep.mubr.bf16.mxu0 0
      %766 = vmatmul.mubr.bf16.gmra.mxu0 %v685
      %v767 = vpop.f32.mrf.mxu0
      %v768 = vadd.f32 %v655, %v767
      %v769 = vpop.f32.mrf.mxu0
      %v770 = vpop.f32.mrf.mxu0
      %v771 = vadd.f32 %v655, %v770
      %v772 = vpop.f32.mrf.mxu0
      %773 = vmatprep.mubr.bf16.mxu0 0
      %774 = vmatmul.mubr.bf16.gmra.mxu0 %v688
      %v775 = vpop.f32.mrf.mxu0
      %v776 = vadd.f32 %v655, %v775
      %v777 = vpop.f32.mrf.mxu0
      %v778 = vpop.f32.mrf.mxu0
      %v779 = vadd.f32 %v655, %v778
      %v780 = vpop.f32.mrf.mxu0
      %781 = vmatprep.mubr.bf16.mxu0 0
      %782 = vmatmul.mubr.bf16.gmra.mxu0 %v691
      %v783 = vpop.f32.mrf.mxu0
      %v784 = vadd.f32 %v655, %v783
      %v785 = vpop.f32.mrf.mxu0
      %v786 = vpop.f32.mrf.mxu0
      %v787 = vadd.f32 %v655, %v786
      %v788 = vpop.f32.mrf.mxu0
      %789 = vdwg.mxu0
      %vm790 = vcmask 7168
      %791 = vst.msk [vmem:[%s282] sm:$0xff] %vm790, %v728
      %792 = vst.msk [vmem:[%s282 + $0x8] sm:$0xff] %vm790, %v731
      %793 = vst.msk [vmem:[%s282 + $0x10] sm:$0xff] %vm790, %v736
      %794 = vst.msk [vmem:[%s282 + $0x18] sm:$0xff] %vm790, %v739
      %795 = vst.msk [vmem:[%s282 + $0x20] sm:$0xff] %vm790, %v744
      %796 = vst.msk [vmem:[%s282 + $0x28] sm:$0xff] %vm790, %v747
      %797 = vst.msk [vmem:[%s282 + $0x30] sm:$0xff] %vm790, %v752
      %798 = vst.msk [vmem:[%s282 + $0x38] sm:$0xff] %vm790, %v755
      %799 = vst.msk [vmem:[%s282 + $0x40] sm:$0xff] %vm790, %v760
      %800 = vst.msk [vmem:[%s282 + $0x48] sm:$0xff] %vm790, %v763
      %801 = vst.msk [vmem:[%s282 + $0x50] sm:$0xff] %vm790, %v768
      %802 = vst.msk [vmem:[%s282 + $0x58] sm:$0xff] %vm790, %v771
      %803 = vst.msk [vmem:[%s282 + $0x60] sm:$0xff] %vm790, %v776
      %804 = vst.msk [vmem:[%s282 + $0x68] sm:$0xff] %vm790, %v779
      %805 = vst.msk [vmem:[%s282 + $0x70] sm:$0xff] %vm790, %v784
      %806 = vst.msk [vmem:[%s282 + $0x78] sm:$0xff] %vm790, %v787
      %s807 = smul.u32 16, %s20
      %p808 = scmp.lt.s32.totalorder %s807, 31
      %s809 = scalar_select %p808, %s807, 31
      %s810 = smul.addr %s809, 8
      %s811 = scalar_lea.vmem %s7, %s810
      // Predicated region
      $region49: #{tpu_custom_call.1} parent=47 // pred_check
        %p812 = pneg %p190
      $region50: #{tpu_custom_call.1} parent=47 // pred_check_branch
        %814 = sbr.rel (%p812) target = $region52
      $region51: #{tpu_custom_call.1} parent=47 // pred_region
        %s815 = smul.u32 16, %s20
      $region52: #{tpu_custom_call.1} parent=47 // pred_fallthru
        _
    $region48: #{tpu_custom_call.1} parent=5 // pred_fallthru
      _
    %p816 = scmp.le.s32.totalorder 2, %s15
    // Predicated region
    $region53: #{tpu_custom_call.1} parent=5 // pred_check
      %p817 = pneg %p816
    $region54: #{tpu_custom_call.1} parent=5 // pred_check_branch
      %819 = sbr.rel (%p817) target = $region56
    $region55: #{tpu_custom_call.1} parent=5 // pred_region
      %s820 = ssub.s32 %s15, 2
      // Predicated region
      $region57: #{tpu_custom_call.1} parent=55 // pred_check
        %p821 = pneg %p196
      $region58: #{tpu_custom_call.1} parent=55 // pred_check_branch
        %823 = sbr.rel (%p821) target = $region60
      $region59: #{tpu_custom_call.1} parent=55 // pred_region
        %s824 = smul.u32 16, %s21
        %p825 = scmp.lt.s32.totalorder %s824, 31
        %s826 = scalar_select %p825, %s824, 31
        %s827 = smul.addr %s826, 8
        %s828 = scalar_lea.vmem %s7, %s827
      $region60: #{tpu_custom_call.1} parent=55 // pred_fallthru
        _
    $region56: #{tpu_custom_call.1} parent=5 // pred_fallthru
      _
  $region6: #{tpu_custom_call.1} parent=0 // loop_footer
    %s19 = sadd.s32 1, %s15
  $region7: #{tpu_custom_call.1} parent=0 // loop_footer_branch
    %14 = sbr.rel target = $region3
  $region8: #{tpu_custom_call.1} parent=0 // loop_exit
    _

</llo_original>
